<compile_context>
chip_gen: v5e
topology: v5e:2x2
jax: 0.10.0
libtpu: 0.0.40
codegen_flags: <defaults>
</compile_context>

<pallas_src>
import jax
import jax.numpy as jnp
from jax.experimental import pallas as pl
from jax.experimental.pallas import tpu as pltpu

EPS = 1e-5          # PyTorch BatchNorm1d default eps
LANES = 128
TILE_B_MAX = 1024   # batch tile; comfortably fits scoped VMEM on v5e/v6e/v7x


def _round_up(x, m):
    return (x + m - 1) // m * m


# ---------------------------------------------------------------------------
# Kernel: fused (BN-folded) MLP  ->  sigmoid
# ---------------------------------------------------------------------------
def tabular_kernel(x_ref, w1_ref, w2_ref, w3_ref, bias_ref, o_ref):
    h1p = w1_ref.shape[1]          # padded widths (all multiples of 128)
    h2p = w2_ref.shape[1]
    outp = o_ref.shape[1]

    # Packed bias block: row 0 = b1, row 1 = b2, row 2 = b3 (already padded).
    biases = bias_ref[...]                        # (3, bias_w) f32, lane-dense
    b1 = biases[0:1, :h1p]
    b2 = biases[1:2, :h2p]
    b3 = biases[2:3, :outp]

    # Layer 1: Linear(d_in, H1) + ReLU     (bn_cont folded into w1/b1)
    x = x_ref[...]                                # (TILE_B, d_in), MXU dtype
    h = jnp.dot(x, w1_ref[...], preferred_element_type=jnp.float32) + b1
    h = jnp.maximum(h, 0.0)

    # Layer 2: Linear(H1, H2) + ReLU       (bn1 folded into w2/b2)
    h = jnp.dot(h.astype(w2_ref.dtype), w2_ref[...],
                preferred_element_type=jnp.float32) + b2
    h = jnp.maximum(h, 0.0)

    # Head: Linear(H2, out_pad)            (bn2 folded into w3/b3)
    z = jnp.dot(h.astype(w3_ref.dtype), w3_ref[...],
                preferred_element_type=jnp.float32) + b3

    # sigmoid: exp on EUP, then divide; lane-dense (TILE_B, outp) store.
    o_ref[...] = 1.0 / (1.0 + jnp.exp(-z))


# ---------------------------------------------------------------------------
# Parameters (PyTorch-equivalent) and offline BN folding
# ---------------------------------------------------------------------------
def make_params(key, emb_szs, n_cont, layers, out_sz):
    """Deterministic parameters matching the module's shapes (eval mode)."""
    n_emb = sum(nf for _, nf in emb_szs)
    d_in = n_emb + n_cont
    h1, h2 = layers

    ks = iter(jax.random.split(key, 32))
    u = lambda shape, s=0.5: jax.random.uniform(next(ks), shape, jnp.float32, -s, s)

    params = {}
    params["emb_tables"] = [u((ni, nf)) for ni, nf in emb_szs]

    def bn_params(n):
        return (1.0 + 0.1 * u((1, n)),            # gamma
                0.1 * u((1, n)),                   # beta
                0.1 * u((1, n)),                   # running_mean
                1.0 + 0.1 * jnp.abs(u((1, n))))    # running_var (>0)

    params["bn_cont"] = bn_params(n_cont)
    # Linear weights stored as [n_in, n_out] (x @ W + b) == PyTorch x @ weight.T
    params["w1"], params["b1"] = u((d_in, h1)), u((1, h1))
    params["bn1"] = bn_params(h1)
    params["w2"], params["b2"] = u((h1, h2)), u((1, h2))
    params["bn2"] = bn_params(h2)
    params["w3"], params["b3"] = u((h2, out_sz)), u((1, out_sz))
    params["meta"] = (n_emb, n_cont, out_sz)
    return params


def fold_params(params, mxu_dtype=jnp.bfloat16):
    """Fold eval-mode BatchNorms into the adjacent Linears, pad every layer
    width to a multiple of 128 lanes, and pack biases. Kernel-ready arrays."""
    n_emb, n_cont, out_sz = params["meta"]

    def bn_affine(bn):
        g, b, m, v = bn
        a = g * jax.lax.rsqrt(v + EPS)    # scale
        c = b - m * a                     # shift
        return a, c

    # bn_cont -> continuous rows of W1 and b1:  [emb, bn(xc)] @ W1 + b1
    a_c, c_c = bn_affine(params["bn_cont"])                  # (1, n_cont)
    w1_raw = params["w1"]
    w1 = jnp.concatenate(
        [w1_raw[:n_emb], a_c.reshape(-1, 1) * w1_raw[n_emb:]], axis=0)
    b1 = params["b1"] + c_c @ w1_raw[n_emb:]

    # bn1 -> W2/b2
    a1, c1 = bn_affine(params["bn1"])
    w2 = a1.reshape(-1, 1) * params["w2"]
    b2 = params["b2"] + c1 @ params["w2"]

    # bn2 -> W3/b3
    a2, c2 = bn_affine(params["bn2"])
    w3 = a2.reshape(-1, 1) * params["w3"]
    b3 = params["b3"] + c2 @ params["w3"]

    d_in, h1 = w1.shape
    h2 = w2.shape[1]

    h1p = _round_up(max(h1, LANES), LANES)
    h2p = _round_up(max(h2, LANES), LANES)
    outp = _round_up(max(out_sz, LANES), LANES)

    # Zero-padded columns -> h = relu(0) = 0; zero-padded rows of the next
    # weight -> padded lanes never influence real outputs.
    w1p = jnp.zeros((d_in, h1p), jnp.float32).at[:, :h1].set(w1)
    w2p = jnp.zeros((h1p, h2p), jnp.float32).at[:h1, :h2].set(w2)
    w3p = jnp.zeros((h2p, outp), jnp.float32).at[:h2, :out_sz].set(w3)

    bias_w = max(h1p, h2p, outp)
    biases = jnp.zeros((3, bias_w), jnp.float32)
    biases = biases.at[0, :h1].set(b1[0])
    biases = biases.at[1, :h2].set(b2[0])
    biases = biases.at[2, :out_sz].set(b3[0])

    return {
        "emb_tables": params["emb_tables"],
        "w1": w1p.astype(mxu_dtype),
        "w2": w2p.astype(mxu_dtype),
        "w3": w3p.astype(mxu_dtype),
        "biases": biases,                 # f32: bias / ReLU / sigmoid stay f32
        "meta": (n_emb, n_cont, out_sz),
        "mxu_dtype": mxu_dtype,
    }


# ---------------------------------------------------------------------------
# Forward wrapper
# ---------------------------------------------------------------------------
def tabular_forward(x_cat, x_cont, folded):
    n_emb, n_cont, out_sz = folded["meta"]
    mxu_dtype = folded["mxu_dtype"]
    w1, w2, w3, biases = folded["w1"], folded["w2"], folded["w3"], folded["biases"]
    d_in, h1p = w1.shape
    h2p = w2.shape[1]
    outp = w3.shape[1]
    B = x_cat.shape[0]

    # Glue: embedding gather + concat (emb_drop is identity in eval mode;
    # bn_cont is folded into w1/b1 so raw x_cont is concatenated directly).
    # TODO(synk): for large-batch serving, fuse the gather into the kernel
    # (tables are tiny and fit VMEM) to avoid the extra HBM round trip.
    emb = jnp.concatenate(
        [folded["emb_tables"][i][x_cat[:, i]] for i in range(x_cat.shape[1])],
        axis=1)
    x = jnp.concatenate([emb, x_cont.astype(jnp.float32)], axis=1)
    x = x.astype(mxu_dtype)                       # (B, d_in) in MXU dtype

    tile_b = min(TILE_B_MAX, _round_up(B, 8))
    b_pad = _round_up(B, tile_b)
    if b_pad != B:
        x = jnp.pad(x, ((0, b_pad - B), (0, 0)))
    n_tiles = b_pad // tile_b

    flops = int(2 * b_pad * (d_in * h1p + h1p * h2p + h2p * outp))
    bytes_accessed = int(
        x.size * x.dtype.itemsize
        + w1.size * w1.dtype.itemsize + w2.size * w2.dtype.itemsize
        + w3.size * w3.dtype.itemsize + biases.size * 4
        + b_pad * outp * 4)

    out = pl.pallas_call(
        tabular_kernel,
        out_shape=jax.ShapeDtypeStruct((b_pad, outp), jnp.float32),
        grid=(n_tiles,),
        in_specs=[
            # activations: one batch tile per grid step (auto-pipelined)
            pl.BlockSpec((tile_b, d_in), lambda i: (i, 0)),
            # weights / packed biases: VMEM-resident across all grid steps
            pl.BlockSpec(w1.shape, lambda i: (0, 0)),
            pl.BlockSpec(w2.shape, lambda i: (0, 0)),
            pl.BlockSpec(w3.shape, lambda i: (0, 0)),
            pl.BlockSpec(biases.shape, lambda i: (0, 0)),
        ],
        out_specs=pl.BlockSpec((tile_b, outp), lambda i: (i, 0)),
        compiler_params=pltpu.CompilerParams(
            dimension_semantics=("parallel",)),      # megacore sharding on v7x
        cost_estimate=pl.CostEstimate(
            flops=flops,
            transcendentals=int(b_pad * outp),       # sigmoid -> exp
            bytes_accessed=bytes_accessed),
    )(x, w1, w2, w3, biases)

    return out[:B, :out_sz]


# ---------------------------------------------------------------------------
# Pure-JAX reference of the PyTorch forward (eval mode, unfolded, f32)
# ---------------------------------------------------------------------------
def reference_forward(x_cat, x_cont, params):
    n_emb, n_cont, out_sz = params["meta"]
    emb = jnp.concatenate(
        [params["emb_tables"][i][x_cat[:, i]] for i in range(x_cat.shape[1])],
        axis=1)
    gc, bc, mc, vc = params["bn_cont"]
    xc = (x_cont - mc) / jnp.sqrt(vc + EPS) * gc + bc
    x = jnp.concatenate([emb, xc], axis=1)
    h = jnp.maximum(x @ params["w1"] + params["b1"], 0.0)
    g1, be1, m1, v1 = params["bn1"]
    h = (h - m1) / jnp.sqrt(v1 + EPS) * g1 + be1
    h = jnp.maximum(h @ params["w2"] + params["b2"], 0.0)
    g2, be2, m2, v2 = params["bn2"]
    h = (h - m2) / jnp.sqrt(v2 + EPS) * g2 + be2
    return jax.nn.sigmoid(h @ params["w3"] + params["b3"])


if __name__ == "__main__":
    # Module config: 3 categorical features, 5 continuous, hidden [32, 16], 2 outputs.
    emb_szs = [(10, 4), (7, 3), (5, 2)]   # n_emb = 9, d_in = 14
    n_cont = 5
    layers = [32, 16]
    out_sz = 2
    B = 8

    key = jax.random.PRNGKey(0)
    kp, kcat, kcont = jax.random.split(key, 3)
    params = make_params(kp, emb_szs, n_cont, layers, out_sz)

    x_cat = jnp.stack(
        [jax.random.randint(jax.random.fold_in(kcat, i), (B,), 0, ni)
         for i, (ni, _) in enumerate(emb_szs)], axis=1).astype(jnp.int32)
    x_cont = jax.random.normal(kcont, (B, n_cont), jnp.float32)

    ref = reference_forward(x_cat, x_cont, params)

    # f32-MXU path.  Tolerance covers TPU default matmul precision (bf16
    # passes) which affects both the kernel and the pure-JAX reference.
    out_f32 = tabular_forward(x_cat, x_cont, fold_params(params, jnp.float32))
    jax.block_until_ready(out_f32)
    assert out_f32.shape == (B, out_sz)
    assert jnp.allclose(out_f32, ref, atol=2e-2, rtol=2e-2), "f32 mismatch vs reference"

    # bf16-into-MXU path (f32 accumulate, f32 elementwise): looser tolerance.
    out_bf16 = tabular_forward(x_cat, x_cont, fold_params(params, jnp.bfloat16))
    jax.block_until_ready(out_bf16)
    assert out_bf16.shape == (B, out_sz)
    assert jnp.allclose(out_bf16, ref, atol=3e-2, rtol=3e-2), "bf16 mismatch vs reference"

    print("KERNEL_OK")
</pallas_src>

<mosaic_0001>
module attributes {stable_mosaic.version = 11 : i64} {
  func.func @tabular_kernel(%arg0: i32, %arg1: memref<8x14xf32, #tpu.memory_space<vmem>>, %arg2: memref<14x128xf32, #tpu.memory_space<vmem>>, %arg3: memref<128x128xf32, #tpu.memory_space<vmem>>, %arg4: memref<128x128xf32, #tpu.memory_space<vmem>>, %arg5: memref<3x128xf32, #tpu.memory_space<vmem>>, %arg6: memref<8x128xf32, #tpu.memory_space<vmem>>) attributes {dimension_semantics = [#tpu.dimension_semantics<parallel>], iteration_bounds = array<i64: 1>, scalar_prefetch = 0 : i64, scratch_operands = 0 : i64, tpu.core_type = #tpu.core_type<tc>, window_params = [{transform_indices = @transform_0, window_bounds = array<i64: 8, 14>}, {pipeline_mode = #tpu.pipeline_mode<synchronous>, transform_indices = @transform_1, window_bounds = array<i64: 14, 128>}, {pipeline_mode = #tpu.pipeline_mode<synchronous>, transform_indices = @transform_2, window_bounds = array<i64: 128, 128>}, {pipeline_mode = #tpu.pipeline_mode<synchronous>, transform_indices = @transform_3, window_bounds = array<i64: 128, 128>}, {pipeline_mode = #tpu.pipeline_mode<synchronous>, transform_indices = @transform_4, window_bounds = array<i64: 3, 128>}, {transform_indices = @transform_5, window_bounds = array<i64: 8, 128>}]} {
    %c0 = arith.constant 0 : index
    %c0_0 = arith.constant 0 : index
    %0 = vector.load %arg5[%c0, %c0_0] : memref<3x128xf32, #tpu.memory_space<vmem>>, vector<3x128xf32>
    %1 = vector.extract_strided_slice %0 {offsets = [0, 0], sizes = [1, 128], strides = [1, 1]} : vector<3x128xf32> to vector<1x128xf32>
    %2 = vector.extract_strided_slice %0 {offsets = [1, 0], sizes = [1, 128], strides = [1, 1]} : vector<3x128xf32> to vector<1x128xf32>
    %3 = vector.extract_strided_slice %0 {offsets = [2, 0], sizes = [1, 128], strides = [1, 1]} : vector<3x128xf32> to vector<1x128xf32>
    %c0_1 = arith.constant 0 : index
    %c0_2 = arith.constant 0 : index
    %4 = vector.load %arg1[%c0_1, %c0_2] : memref<8x14xf32, #tpu.memory_space<vmem>>, vector<8x14xf32>
    %c0_3 = arith.constant 0 : index
    %c0_4 = arith.constant 0 : index
    %5 = vector.load %arg2[%c0_3, %c0_4] : memref<14x128xf32, #tpu.memory_space<vmem>>, vector<14x128xf32>
    %cst = arith.constant dense<0.000000e+00> : vector<8x128xf32>
    %6 = tpu.matmul %4, %5, %cst {dimension_numbers = #tpu.dot_dimension_numbers<[1], [0], [0], [1], [0, 0, 1, 1], [], []>} : vector<8x14xf32>, vector<14x128xf32>, vector<8x128xf32> -> vector<8x128xf32>
    %7 = vector.broadcast %1 : vector<1x128xf32> to vector<8x128xf32>
    %8 = arith.addf %6, %7 : vector<8x128xf32>
    %cst_5 = arith.constant 0.000000e+00 : f32
    %9 = vector.broadcast %cst_5 : f32 to vector<8x128xf32>
    %10 = arith.maximumf %8, %9 : vector<8x128xf32>
    %c0_6 = arith.constant 0 : index
    %c0_7 = arith.constant 0 : index
    %11 = vector.load %arg3[%c0_6, %c0_7] : memref<128x128xf32, #tpu.memory_space<vmem>>, vector<128x128xf32>
    %cst_8 = arith.constant dense<0.000000e+00> : vector<8x128xf32>
    %12 = tpu.matmul %10, %11, %cst_8 {dimension_numbers = #tpu.dot_dimension_numbers<[1], [0], [0], [1], [0, 0, 1, 1], [], []>} : vector<8x128xf32>, vector<128x128xf32>, vector<8x128xf32> -> vector<8x128xf32>
    %13 = vector.broadcast %2 : vector<1x128xf32> to vector<8x128xf32>
    %14 = arith.addf %12, %13 : vector<8x128xf32>
    %cst_9 = arith.constant 0.000000e+00 : f32
    %15 = vector.broadcast %cst_9 : f32 to vector<8x128xf32>
    %16 = arith.maximumf %14, %15 : vector<8x128xf32>
    %c0_10 = arith.constant 0 : index
    %c0_11 = arith.constant 0 : index
    %17 = vector.load %arg4[%c0_10, %c0_11] : memref<128x128xf32, #tpu.memory_space<vmem>>, vector<128x128xf32>
    %cst_12 = arith.constant dense<0.000000e+00> : vector<8x128xf32>
    %18 = tpu.matmul %16, %17, %cst_12 {dimension_numbers = #tpu.dot_dimension_numbers<[1], [0], [0], [1], [0, 0, 1, 1], [], []>} : vector<8x128xf32>, vector<128x128xf32>, vector<8x128xf32> -> vector<8x128xf32>
    %19 = vector.broadcast %3 : vector<1x128xf32> to vector<8x128xf32>
    %20 = arith.addf %18, %19 : vector<8x128xf32>
    %cst_13 = arith.constant 0.000000e+00 : f32
    %21 = vector.broadcast %cst_13 : f32 to vector<8x128xf32>
    %22 = arith.subf %21, %20 : vector<8x128xf32>
    %23 = math.exp %22 : vector<8x128xf32>
    %cst_14 = arith.constant 1.000000e+00 : f32
    %24 = vector.broadcast %cst_14 : f32 to vector<8x128xf32>
    %25 = arith.addf %24, %23 : vector<8x128xf32>
    %cst_15 = arith.constant 1.000000e+00 : f32
    %26 = vector.broadcast %cst_15 : f32 to vector<8x128xf32>
    %27 = arith.divf %26, %25 : vector<8x128xf32>
    %c0_16 = arith.constant 0 : index
    %c0_17 = arith.constant 0 : index
    %28 = vector.load %arg6[%c0_16, %c0_17] : memref<8x128xf32, #tpu.memory_space<vmem>>, vector<8x128xf32>
    tpu.vector_store %arg6[%c0_16, %c0_17], %27 {strides = array<i32>} : memref<8x128xf32, #tpu.memory_space<vmem>>, vector<8x128xf32>,
    return
  }
  func.func @transform_0(%arg0: i32) -> (i32, i32) {
    %c0_i32 = arith.constant 0 : i32
    %c0_i32_0 = arith.constant 0 : i32
    return %arg0, %c0_i32 : i32, i32
  }
  func.func @transform_1(%arg0: i32) -> (i32, i32) {
    %c0_i32 = arith.constant 0 : i32
    %c0_i32_0 = arith.constant 0 : i32
    %c0_i32_1 = arith.constant 0 : i32
    return %c0_i32, %c0_i32_0 : i32, i32
  }
  func.func @transform_2(%arg0: i32) -> (i32, i32) {
    %c0_i32 = arith.constant 0 : i32
    %c0_i32_0 = arith.constant 0 : i32
    %c0_i32_1 = arith.constant 0 : i32
    return %c0_i32, %c0_i32_0 : i32, i32
  }
  func.func @transform_3(%arg0: i32) -> (i32, i32) {
    %c0_i32 = arith.constant 0 : i32
    %c0_i32_0 = arith.constant 0 : i32
    %c0_i32_1 = arith.constant 0 : i32
    return %c0_i32, %c0_i32_0 : i32, i32
  }
  func.func @transform_4(%arg0: i32) -> (i32, i32) {
    %c0_i32 = arith.constant 0 : i32
    %c0_i32_0 = arith.constant 0 : i32
    %c0_i32_1 = arith.constant 0 : i32
    return %c0_i32, %c0_i32_0 : i32, i32
  }
  func.func @transform_5(%arg0: i32) -> (i32, i32) {
    %c0_i32 = arith.constant 0 : i32
    %c0_i32_0 = arith.constant 0 : i32
    return %arg0, %c0_i32 : i32, i32
  }
}

</mosaic_0001>

<llo_original>
// kernel: tpu_custom_call.1
$region0: #{tpu_custom_call.1}
  #allocation0 [shape = 'u32[]', space=smem, size = 0x4, offset = 0x4, fixed_abs, tag = 'smem constant byte address 0x4 - core index']
  #allocation1 [shape = 'u32[72,128]{1,0:T(1,128)}', space=vmem, size = 0x9000, scoped, tag = 'internal scratch']
  %s0 = inlined_call_operand.hbm [shape: f32[8,14], index: 0, kind: input, shape index: {}]
  %s1 = inlined_call_operand.hbm [shape: f32[14,128], index: 1, kind: input, shape index: {}]
  %s2 = inlined_call_operand.hbm [shape: f32[128,128], index: 2, kind: input, shape index: {}]
  %s3 = inlined_call_operand.hbm [shape: f32[128,128], index: 3, kind: input, shape index: {}]
  %s4 = inlined_call_operand.hbm [shape: f32[3,128], index: 4, kind: input, shape index: {}]
  %s5 = inlined_call_operand.hbm [shape: f32[8,128], index: 5, kind: output, shape index: {}]
  %s6 = sld [smem:[#allocation0]]
  $region50: #{tpu_custom_call.1} parent=0
    _
  %s8 = ssub.s32 1, %s6
  %s9 = scalar_select 0, %s8, %s6
  $region1: #{tpu_custom_call.1} parent=0
    #allocation2 [shape = 'u8[4096]{0}', space=vmem, size = 0x1000, scoped, tag = 'input window, operand 0, single buffered']
    #allocation3 [shape = 's32[1]{0}', space=sflag, size = 0x4, scoped, tag = 'scoped memory for tpu_custom_call.1']
    #allocation4 [shape = 's32[1]{0}', space=sflag, size = 0x4, scoped, tag = 'scoped memory for tpu_custom_call.1']
    #allocation5 [shape = 'u8[8192]{0}', space=vmem, size = 0x2000, scoped, tag = 'input window, operand 1, single buffered']
    #allocation6 [shape = 's32[1]{0}', space=sflag, size = 0x4, scoped, tag = 'scoped memory for tpu_custom_call.1']
    #allocation7 [shape = 'u8[65536]{0}', space=vmem, size = 0x10000, scoped, tag = 'input window, operand 2, single buffered']
    #allocation8 [shape = 'u8[65536]{0}', space=vmem, size = 0x10000, scoped, tag = 'input window, operand 3, single buffered']
    #allocation9 [shape = 's32[1]{0}', space=sflag, size = 0x4, scoped, tag = 'scoped memory for tpu_custom_call.1']
    #allocation10 [shape = 'u8[2048]{0}', space=vmem, size = 0x800, scoped, tag = 'input window, operand 4, single buffered']
    #allocation11 [shape = 'u8[4096]{0}', space=vmem, size = 0x1000, scoped, tag = 'output window, operand 0, single buffered']
    %10 = vsyncpa [#allocation3], 0
    %11 = vsyncpa [#allocation6], 0
    %12 = vsyncpa [#allocation9], 0
    %13 = vsyncpa [#allocation4], 0
    // Predicated region
    $region2: #{tpu_custom_call.1} parent=1 // pred_check
      _
    $region3: #{tpu_custom_call.1} parent=1 // pred_check_branch
      %15 = sbr.rel (0) target = $region5
    $region4: #{tpu_custom_call.1} parent=1 // pred_region
      %17 = vsyncadd [#allocation3], 0
      %s19 = sshll.u32 %s0, 4
      %s20 = int_to_ptr.hbm [resolvable:$true] %s19
      %s21 = sshll.u32 [#allocation2], 4
      %s22 = int_to_ptr.vmem [resolvable:$true] %s21
      %24 = dma.hbm_to_vmem [thread:$0]  %s20, 128, %s22, [#allocation3]
    $region5: #{tpu_custom_call.1} parent=1 // pred_fallthru
      _
    // Predicated region
    $region6: #{tpu_custom_call.1} parent=1 // pred_check
      _
    $region7: #{tpu_custom_call.1} parent=1 // pred_check_branch
      %26 = sbr.rel (0) target = $region9
    $region8: #{tpu_custom_call.1} parent=1 // pred_region
      %28 = vsyncadd [#allocation6], 0
      %s29 = sshll.u32 %s1, 4
      %s30 = int_to_ptr.hbm [resolvable:$true] %s29
      %s31 = sshll.u32 [#allocation5], 4
      %s32 = int_to_ptr.vmem [resolvable:$true] %s31
      %37 = dma.hbm_to_vmem [thread:$0]  %s30, 256, %s32, [#allocation6], 128, 128, 8
    $region9: #{tpu_custom_call.1} parent=1 // pred_fallthru
      _
    // Predicated region
    $region10: #{tpu_custom_call.1} parent=1 // pred_check
      _
    $region11: #{tpu_custom_call.1} parent=1 // pred_check_branch
      %39 = sbr.rel (0) target = $region13
    $region12: #{tpu_custom_call.1} parent=1 // pred_region
      %41 = vsyncadd [#allocation6], 0
      %s42 = sshll.u32 %s2, 4
      %s43 = int_to_ptr.hbm [resolvable:$true] %s42
      %s44 = sshll.u32 [#allocation7], 4
      %s45 = int_to_ptr.vmem [resolvable:$true] %s44
      %50 = dma.hbm_to_vmem [thread:$0]  %s43, 2048, %s45, [#allocation6], 128, 128, 8
    $region13: #{tpu_custom_call.1} parent=1 // pred_fallthru
      _
    // Predicated region
    $region14: #{tpu_custom_call.1} parent=1 // pred_check
      _
    $region15: #{tpu_custom_call.1} parent=1 // pred_check_branch
      %52 = sbr.rel (0) target = $region17
    $region16: #{tpu_custom_call.1} parent=1 // pred_region
      %54 = vsyncadd [#allocation9], 0
      %s55 = sshll.u32 %s3, 4
      %s56 = int_to_ptr.hbm [resolvable:$true] %s55
      %s57 = sshll.u32 [#allocation8], 4
      %s58 = int_to_ptr.vmem [resolvable:$true] %s57
      %63 = dma.hbm_to_vmem [thread:$0]  %s56, 2048, %s58, [#allocation9], 128, 128, 8
    $region17: #{tpu_custom_call.1} parent=1 // pred_fallthru
      _
    // Predicated region
    $region18: #{tpu_custom_call.1} parent=1 // pred_check
      _
    $region19: #{tpu_custom_call.1} parent=1 // pred_check_branch
      %65 = sbr.rel (0) target = $region21
    $region20: #{tpu_custom_call.1} parent=1 // pred_region
      %67 = vsyncadd [#allocation9], 0
      %s69 = sshll.u32 %s4, 4
      %s70 = int_to_ptr.hbm [resolvable:$true] %s69
      %s71 = sshll.u32 [#allocation10], 4
      %s72 = int_to_ptr.vmem [resolvable:$true] %s71
      %74 = dma.hbm_to_vmem [thread:$0]  %s70, 64, %s72, [#allocation9]
    $region21: #{tpu_custom_call.1} parent=1 // pred_fallthru
      _
    // Predicated region
    $region22: #{tpu_custom_call.1} parent=1 // pred_check
      _
    $region23: #{tpu_custom_call.1} parent=1 // pred_check_branch
      %76 = sbr.rel (0) target = $region25
    $region24: #{tpu_custom_call.1} parent=1 // pred_region
      %78 = dma.done [#allocation3], 128
    $region25: #{tpu_custom_call.1} parent=1 // pred_fallthru
      _
    // Predicated region
    $region26: #{tpu_custom_call.1} parent=1 // pred_check
      _
    $region27: #{tpu_custom_call.1} parent=1 // pred_check_branch
      %80 = sbr.rel (0) target = $region29
    $region28: #{tpu_custom_call.1} parent=1 // pred_region
      %82 = dma.done [#allocation6], 256
    $region29: #{tpu_custom_call.1} parent=1 // pred_fallthru
      _
    // Predicated region
    $region30: #{tpu_custom_call.1} parent=1 // pred_check
      _
    $region31: #{tpu_custom_call.1} parent=1 // pred_check_branch
      %84 = sbr.rel (0) target = $region33
    $region32: #{tpu_custom_call.1} parent=1 // pred_region
      %86 = dma.done [#allocation6], 2048
    $region33: #{tpu_custom_call.1} parent=1 // pred_fallthru
      _
    // Predicated region
    $region34: #{tpu_custom_call.1} parent=1 // pred_check
      _
    $region35: #{tpu_custom_call.1} parent=1 // pred_check_branch
      %88 = sbr.rel (0) target = $region37
    $region36: #{tpu_custom_call.1} parent=1 // pred_region
      %90 = dma.done [#allocation9], 2048
    $region37: #{tpu_custom_call.1} parent=1 // pred_fallthru
      _
    // Predicated region
    $region38: #{tpu_custom_call.1} parent=1 // pred_check
      _
    $region39: #{tpu_custom_call.1} parent=1 // pred_check_branch
      %92 = sbr.rel (0) target = $region41
    $region40: #{tpu_custom_call.1} parent=1 // pred_region
      %94 = dma.done [#allocation9], 64
    $region41: #{tpu_custom_call.1} parent=1 // pred_fallthru
      _
    %v95 = vld [vmem:[#allocation10] sm:$0x7]
    %v96 = vld [vmem:[#allocation2] sm:$0xff]
    %v97 = vld [vmem:[#allocation5] sm:$0xff]
    %v98 = vld [vmem:[#allocation5 + $0x8] sm:$0x3f]
    %v99 = vperm.slane %v95, 0
    %vm100 = vcmask 113664
    %v102 = vsel %vm100, %v96, 0
    %vm104 = vcmask 1045504
    %v106 = vsel %vm104, %v98, 0
    %108 = vmatpush.msra.mxu0 0.0
    %109 = vmatpush.msra.mxu0 0.0
    %110 = vmatpush.msra.mxu0 0.0
    %111 = vmatpush.msra.mxu0 0.0
    %112 = vmatpush.msra.mxu0 0.0
    %113 = vmatpush.msra.mxu0 0.0
    %114 = vmatpush.msra.mxu0 0.0
    %115 = vmatpush.msra.mxu0 0.0
    %116 = vmatpush.msra.mxu0 0.0
    %117 = vmatpush.msra.mxu0 0.0
    %118 = vmatpush.msra.mxu0 0.0
    %119 = vmatpush.msra.mxu0 0.0
    %120 = vmatpush.msra.mxu0 0.0
    %121 = vmatpush.msra.mxu0 0.0
    %122 = vmatpush.msra.mxu0 %v106
    %123 = vmatpush.msra.mxu0 %v97
    %124 = vmatmul.f32.gmra.mxu0 %v102
    %v125 = vpop.f32.mrf.mxu0
    %v126 = vadd.f32 %v99, %v125
    %127 = vdwg.mxu0
    %v128 = vmax.f32 %v126, 0.0
    %v129 = vld [vmem:[#allocation7] sm:$0xff]
    %v130 = vld [vmem:[#allocation7 + $0x8] sm:$0xff]
    %v131 = vld [vmem:[#allocation7 + $0x10] sm:$0xff]
    %v132 = vld [vmem:[#allocation7 + $0x18] sm:$0xff]
    %v133 = vld [vmem:[#allocation7 + $0x20] sm:$0xff]
    %v134 = vld [vmem:[#allocation7 + $0x28] sm:$0xff]
    %v135 = vld [vmem:[#allocation7 + $0x30] sm:$0xff]
    %v136 = vld [vmem:[#allocation7 + $0x38] sm:$0xff]
    %v137 = vld [vmem:[#allocation7 + $0x40] sm:$0xff]
    %v138 = vld [vmem:[#allocation7 + $0x48] sm:$0xff]
    %v139 = vld [vmem:[#allocation7 + $0x50] sm:$0xff]
    %v140 = vld [vmem:[#allocation7 + $0x58] sm:$0xff]
    %v141 = vld [vmem:[#allocation7 + $0x60] sm:$0xff]
    %v142 = vld [vmem:[#allocation7 + $0x68] sm:$0xff]
    %v143 = vld [vmem:[#allocation7 + $0x70] sm:$0xff]
    %v144 = vld [vmem:[#allocation7 + $0x78] sm:$0xff]
    %v145 = vperm.slane %v95, 1
    %146 = vmatpush.msra.mxu0 %v144
    %147 = vmatpush.msra.mxu0 %v143
    %148 = vmatpush.msra.mxu0 %v142
    %149 = vmatpush.msra.mxu0 %v141
    %150 = vmatpush.msra.mxu0 %v140
    %151 = vmatpush.msra.mxu0 %v139
    %152 = vmatpush.msra.mxu0 %v138
    %153 = vmatpush.msra.mxu0 %v137
    %154 = vmatpush.msra.mxu0 %v136
    %155 = vmatpush.msra.mxu0 %v135
    %156 = vmatpush.msra.mxu0 %v134
    %157 = vmatpush.msra.mxu0 %v133
    %158 = vmatpush.msra.mxu0 %v132
    %159 = vmatpush.msra.mxu0 %v131
    %160 = vmatpush.msra.mxu0 %v130
    %161 = vmatpush.msra.mxu0 %v129
    %162 = vmatmul.f32.gmra.mxu0 %v128
    %v163 = vpop.f32.mrf.mxu0
    %v164 = vadd.f32 %v145, %v163
    %165 = vdwg.mxu0
    %v166 = vmax.f32 %v164, 0.0
    %v167 = vld [vmem:[#allocation8] sm:$0xff]
    %v168 = vld [vmem:[#allocation8 + $0x8] sm:$0xff]
    %v169 = vld [vmem:[#allocation8 + $0x10] sm:$0xff]
    %v170 = vld [vmem:[#allocation8 + $0x18] sm:$0xff]
    %v171 = vld [vmem:[#allocation8 + $0x20] sm:$0xff]
    %v172 = vld [vmem:[#allocation8 + $0x28] sm:$0xff]
    %v173 = vld [vmem:[#allocation8 + $0x30] sm:$0xff]
    %v174 = vld [vmem:[#allocation8 + $0x38] sm:$0xff]
    %v175 = vld [vmem:[#allocation8 + $0x40] sm:$0xff]
    %v176 = vld [vmem:[#allocation8 + $0x48] sm:$0xff]
    %v177 = vld [vmem:[#allocation8 + $0x50] sm:$0xff]
    %v178 = vld [vmem:[#allocation8 + $0x58] sm:$0xff]
    %v179 = vld [vmem:[#allocation8 + $0x60] sm:$0xff]
    %v180 = vld [vmem:[#allocation8 + $0x68] sm:$0xff]
    %v181 = vld [vmem:[#allocation8 + $0x70] sm:$0xff]
    %v182 = vld [vmem:[#allocation8 + $0x78] sm:$0xff]
    %v183 = vperm.slane %v95, 2
    %184 = vmatpush.msra.mxu0 %v182
    %185 = vmatpush.msra.mxu0 %v181
    %186 = vmatpush.msra.mxu0 %v180
    %187 = vmatpush.msra.mxu0 %v179
    %188 = vmatpush.msra.mxu0 %v178
    %189 = vmatpush.msra.mxu0 %v177
    %190 = vmatpush.msra.mxu0 %v176
    %191 = vmatpush.msra.mxu0 %v175
    %192 = vmatpush.msra.mxu0 %v174
    %193 = vmatpush.msra.mxu0 %v173
    %194 = vmatpush.msra.mxu0 %v172
    %195 = vmatpush.msra.mxu0 %v171
    %196 = vmatpush.msra.mxu0 %v170
    %197 = vmatpush.msra.mxu0 %v169
    %198 = vmatpush.msra.mxu0 %v168
    %199 = vmatpush.msra.mxu0 %v167
    %200 = vmatmul.f32.gmra.mxu0 %v166
    %v201 = vpop.f32.mrf.mxu0
    %v202 = vadd.f32 %v183, %v201
    %203 = vdwg.mxu0
    %v204 = vsub.f32 0.0, %v202
    %v205 = vmul.f32 %v204, 1.442695
    %v206 = vpow.pop %v205
    %v207 = vadd.f32 %v206, 1.0
    %v208 = vrcp.pop %v207
    %v209 = vmul.f32 %v207, %v208
    %v210 = vsub.f32 1.0, %v209
    %v211 = vmul.f32 %v208, %v210
    %v212 = vadd.f32 %v208, %v211
    %vm213 = vweird.f32 %v207
    %vm214 = vweird.f32 %v208
    %vm215 = vmor %vm213, %vm214
    %v216 = vsel %vm215, %v208, %v212
    %v217 = vand.u32 2147483647, %v207
    %vm218 = vcmp.eq.f32.partialorder %v217, 8.507059e+37
    %v219 = vand.u32 %v207, 2147483648
    %v220 = vor.u32 1.1754944e-38, %v219
    %v221 = vsel %vm218, %v220, %v216
    %v222 = vmul.f32 1.0, %v221
    %223 = vst [vmem:[#allocation11] sm:$0xff] %v222
    // Predicated region
    $region42: #{tpu_custom_call.1} parent=1 // pred_check
      _
    $region43: #{tpu_custom_call.1} parent=1 // pred_check_branch
      %225 = sbr.rel (0) target = $region45
    $region44: #{tpu_custom_call.1} parent=1 // pred_region
      %227 = vsyncadd [#allocation4], 0
      %s229 = sshll.u32 [#allocation11], 4
      %s230 = int_to_ptr.vmem [resolvable:$true] %s229
      %s231 = sshll.u32 %s5, 4
      %s232 = int_to_ptr.hbm [resolvable:$true] %s231
      %234 = dma.vmem_to_hbm [thread:$0]  %s230, 128, %s232, [#allocation4]
    $region45: #{tpu_custom_call.1} parent=1 // pred_fallthru
      _
    // Predicated region
    $region46: #{tpu_custom_call.1} parent=1 // pred_check
      _
    $region47: #{tpu_custom_call.1} parent=1 // pred_check_branch
      %236 = sbr.rel (0) target = $region49
    $region48: #{tpu_custom_call.1} parent=1 // pred_region
      %238 = dma.done [#allocation4], 128
    $region49: #{tpu_custom_call.1} parent=1 // pred_fallthru
      _
    %239 = vsyncpa [#allocation3], 1
    %240 = vsyncpa [#allocation6], 1
    %241 = vsyncpa [#allocation9], 1
    %242 = vsyncpa [#allocation4], 1

</llo_original>
